<compile_context>
chip_gen: v5e
topology: v5e:2x2
jax: 0.10.0
libtpu: 0.0.40
codegen_flags: <defaults>
</compile_context>

<pallas_src>
import jax
import jax.numpy as jnp
from jax.experimental import pallas as pl
from jax.experimental.pallas import tpu as pltpu

nInput = 1000
nHidden = 32
nOutput = 10
nLayer = 5

H_PAD = 128    # padded hidden/output dim (one full lane tile)


def _cdiv(a, b):
    return -(-a // b)


def _round_up(x, m):
    return _cdiv(x, m) * m


# ---------------------------------------------------------------------------
# Kernel: one batch tile of the whole 5-layer MLP, all operands VMEM-resident.
#   x_ref : (tb, 1000)      f32   (raw rows; cast to bf16 in-kernel)
#   w0_ref: (1000, 128)     bf16  (layer 0 weight, cols zero-padded 32->128)
#   wh_ref: (4, 128, 128)   bf16  (layers 1..3 + output layer, zero-padded)
#   b_ref : (5, 128)        f32   (all biases, zero-padded)
#   o_ref : (tb, 128)       bf16  (cols 0..9 are the real outputs)
# ---------------------------------------------------------------------------
def mlp_kernel(x_ref, w0_ref, wh_ref, b_ref, o_ref):
    # Cast the freshly DMA'd f32 rows to bf16 (VPU work, hidden under the x DMA).
    x = x_ref[...].astype(jnp.bfloat16)

    # Layer 0: (tb, 1000) @ (1000, 128) on the MXU, f32 accumulate.
    h = jnp.dot(x, w0_ref[...], preferred_element_type=jnp.float32)
    h = jnp.maximum(h + b_ref[0:1, :], 0.0)

    # Hidden layers 1..3: (tb, 128) @ (128, 128); cast to bf16 only for the dot.
    for i in range(3):
        h = jnp.dot(h.astype(jnp.bfloat16), wh_ref[i],
                    preferred_element_type=jnp.float32)
        h = jnp.maximum(h + b_ref[i + 1:i + 2, :], 0.0)

    # Output layer (no activation); lane-dense (tb, 128) bf16 store (unmasked vst).
    out = jnp.dot(h.astype(jnp.bfloat16), wh_ref[3],
                  preferred_element_type=jnp.float32) + b_ref[4:5, :]
    o_ref[...] = out.astype(o_ref.dtype)


# ---------------------------------------------------------------------------
# Parameter packing: 5 (w, b) pairs -> 3 padded slabs (done once, off the hot path).
# ---------------------------------------------------------------------------
def pack_params(params):
    (w0, b0), (w1, b1), (w2, b2), (w3, b3), (w4, b4) = params

    # w0 keeps its natural K=1000; only the output lanes are padded 32 -> 128.
    w0p = jnp.zeros((nInput, H_PAD), jnp.float32)
    w0p = w0p.at[:, :nHidden].set(w0).astype(jnp.bfloat16)

    wh = jnp.zeros((4, H_PAD, H_PAD), jnp.float32)
    wh = wh.at[0, :nHidden, :nHidden].set(w1)
    wh = wh.at[1, :nHidden, :nHidden].set(w2)
    wh = wh.at[2, :nHidden, :nHidden].set(w3)
    wh = wh.at[3, :nHidden, :nOutput].set(w4)
    wh = wh.astype(jnp.bfloat16)

    bias = jnp.zeros((5, H_PAD), jnp.float32)
    bias = bias.at[0, :nHidden].set(b0)
    bias = bias.at[1, :nHidden].set(b1)
    bias = bias.at[2, :nHidden].set(b2)
    bias = bias.at[3, :nHidden].set(b3)
    bias = bias.at[4, :nOutput].set(b4)

    return w0p, wh, bias


def _choose_batch_tile(B, max_tile):
    """Batch tile: multiple of 8 sublanes, <= max_tile, picked from B so the last
    tile is nearly full, and the grid has an even number of >= 2 tiles whenever
    B > 8 (so v7x's two TensorCores both get work)."""
    if B <= 8:
        return _round_up(max(B, 1), 8)
    n_tiles = 2 * _cdiv(B, 2 * max_tile)            # even tile count >= 2
    return _round_up(_cdiv(B, n_tiles), 8)


# ---------------------------------------------------------------------------
# Wrapper: flatten, tile over batch, call the kernel, slice the real logits.
# ---------------------------------------------------------------------------
def mlp_forward(x, packed, tile_b=1024):
    w0p, whp, biasp = packed

    B = x.shape[0]
    x2d = x.reshape(B, -1)                           # free for contiguous input
    assert x2d.shape[1] == nInput
    x2d = x2d.astype(jnp.float32)                    # no-op for f32 input

    tb = _choose_batch_tile(B, _round_up(tile_b, 8))
    B_pad = _round_up(B, tb)
    if B_pad != B:                                   # pad batch only when needed
        x2d = jnp.pad(x2d, ((0, B_pad - B), (0, 0)))

    grid = (B_pad // tb,)

    # Advisory cost model for XLA scheduling around the custom call
    # (x read once at 4 B/elem, output written once at 2 B/elem, weights resident).
    flops = 2 * B_pad * (nInput * H_PAD + 4 * H_PAD * H_PAD)
    bytes_accessed = (B_pad * nInput * 4                       # x (f32)
                      + int(w0p.size) * 2 + int(whp.size) * 2  # weights (bf16, once)
                      + int(biasp.size) * 4                    # biases (f32)
                      + B_pad * H_PAD * 2)                     # output (bf16)

    out = pl.pallas_call(
        mlp_kernel,
        out_shape=jax.ShapeDtypeStruct((B_pad, H_PAD), jnp.bfloat16),
        grid_spec=pltpu.PrefetchScalarGridSpec(
            num_scalar_prefetch=0,
            grid=grid,
            in_specs=[
                pl.BlockSpec((tb, nInput), lambda i: (i, 0)),          # x tile (pipelined)
                pl.BlockSpec((nInput, H_PAD), lambda i: (0, 0)),       # w0 (resident)
                pl.BlockSpec((4, H_PAD, H_PAD), lambda i: (0, 0, 0)),  # w1..w4 slab
                pl.BlockSpec((5, H_PAD), lambda i: (0, 0)),            # bias slab
            ],
            out_specs=pl.BlockSpec((tb, H_PAD), lambda i: (i, 0)),
        ),
        compiler_params=pltpu.CompilerParams(
            dimension_semantics=("parallel",),      # shard batch tiles across TCs (v7x)
            vmem_limit_bytes=32 * 1024 * 1024,      # tb=1024 uses ~10 MiB; safe on all gens
        ),
        cost_estimate=pl.CostEstimate(
            flops=flops, transcendentals=0, bytes_accessed=bytes_accessed),
    )(x2d, w0p, whp, biasp)

    # NOTE: this slice is an extra HBM pass; if the consumer can take the padded
    # (B_pad, 128) bf16 block (or fuse the slice), return `out` directly instead.
    return out[:B, :nOutput].astype(jnp.float32)


# ---------------------------------------------------------------------------
# Init + reference
# ---------------------------------------------------------------------------
def init_params(key):
    """Deterministic init mirroring the PyTorch module's layer shapes (W stored as (in, out))."""
    dims = []
    for i in range(nLayer - 1):
        dims.append((nInput if i == 0 else nHidden, nHidden))
    dims.append((nHidden, nOutput))

    params = []
    for (fan_in, fan_out) in dims:
        key, kw, kb = jax.random.split(key, 3)
        bound = 1.0 / jnp.sqrt(fan_in)
        w = jax.random.uniform(kw, (fan_in, fan_out), jnp.float32, -bound, bound)
        b = jax.random.uniform(kb, (fan_out,), jnp.float32, -bound, bound)
        params.append((w, b))
    return params


def mlp_reference(x, params, use_bf16=True):
    """Pure-JAX reference matching the PyTorch forward (optionally with the same bf16 casts)."""
    h = x.reshape(x.shape[0], -1).astype(jnp.float32)
    for i, (w, b) in enumerate(params):
        if use_bf16:
            h = jnp.dot(h.astype(jnp.bfloat16), w.astype(jnp.bfloat16),
                        preferred_element_type=jnp.float32) + b
        else:
            h = h @ w + b
        if i < len(params) - 1:
            h = jnp.maximum(h, 0.0)
    return h


if __name__ == "__main__":
    key = jax.random.PRNGKey(0)
    key, kx = jax.random.split(key)

    # batch=2; (2, 10, 10, 10) flattens to (2, 1000) like torch.flatten(x, 1).
    x = jax.random.normal(kx, (2, 10, 10, 10), dtype=jnp.float32)
    params = init_params(key)
    packed = pack_params(params)

    out = mlp_forward(x, packed)
    out = jax.block_until_ready(out)

    ref = mlp_reference(x, params, use_bf16=True)   # same bf16 operand casts as the kernel
    assert out.shape == (2, nOutput)
    # bf16 output store -> compare at bf16-level tolerance.
    assert jnp.allclose(out, ref, atol=2e-2, rtol=2e-2), (
        f"mismatch vs reference, max|diff|={float(jnp.max(jnp.abs(out - ref)))}")

    print("KERNEL_OK")
</pallas_src>

<mosaic_0001>
module attributes {stable_mosaic.version = 11 : i64} {
  func.func @mlp_kernel(%arg0: i32, %arg1: memref<8x1000xf32, #tpu.memory_space<vmem>>, %arg2: memref<1000x128xbf16, #tpu.memory_space<vmem>>, %arg3: memref<4x128x128xbf16, #tpu.memory_space<vmem>>, %arg4: memref<5x128xf32, #tpu.memory_space<vmem>>, %arg5: memref<8x128xbf16, #tpu.memory_space<vmem>>) attributes {dimension_semantics = [#tpu.dimension_semantics<parallel>], iteration_bounds = array<i64: 1>, scalar_prefetch = 0 : i64, scratch_operands = 0 : i64, tpu.core_type = #tpu.core_type<tc>, window_params = [{transform_indices = @transform_0, window_bounds = array<i64: 8, 1000>}, {pipeline_mode = #tpu.pipeline_mode<synchronous>, transform_indices = @transform_1, window_bounds = array<i64: 1000, 128>}, {pipeline_mode = #tpu.pipeline_mode<synchronous>, transform_indices = @transform_2, window_bounds = array<i64: 4, 128, 128>}, {pipeline_mode = #tpu.pipeline_mode<synchronous>, transform_indices = @transform_3, window_bounds = array<i64: 5, 128>}, {transform_indices = @transform_4, window_bounds = array<i64: 8, 128>}]} {
    %c0 = arith.constant 0 : index
    %c0_0 = arith.constant 0 : index
    %0 = vector.load %arg1[%c0, %c0_0] : memref<8x1000xf32, #tpu.memory_space<vmem>>, vector<8x1000xf32>
    %1 = arith.truncf %0 : vector<8x1000xf32> to vector<8x1000xbf16>
    %c0_1 = arith.constant 0 : index
    %c0_2 = arith.constant 0 : index
    %2 = vector.load %arg2[%c0_1, %c0_2] : memref<1000x128xbf16, #tpu.memory_space<vmem>>, vector<1000x128xbf16>
    %cst = arith.constant dense<0.000000e+00> : vector<8x128xf32>
    %3 = tpu.matmul %1, %2, %cst {dimension_numbers = #tpu.dot_dimension_numbers<[1], [0], [0], [1], [0, 0, 1, 1], [], []>} : vector<8x1000xbf16>, vector<1000x128xbf16>, vector<8x128xf32> -> vector<8x128xf32>
    %c0_3 = arith.constant 0 : index
    %c0_4 = arith.constant 0 : index
    %4 = vector.load %arg4[%c0_3, %c0_4] : memref<5x128xf32, #tpu.memory_space<vmem>>, vector<1x128xf32>
    %5 = vector.broadcast %4 : vector<1x128xf32> to vector<8x128xf32>
    %6 = arith.addf %3, %5 : vector<8x128xf32>
    %cst_5 = arith.constant 0.000000e+00 : f32
    %7 = vector.broadcast %cst_5 : f32 to vector<8x128xf32>
    %8 = arith.maximumf %6, %7 : vector<8x128xf32>
    %9 = arith.truncf %8 : vector<8x128xf32> to vector<8x128xbf16>
    %c0_6 = arith.constant 0 : index
    %c0_7 = arith.constant 0 : index
    %c0_8 = arith.constant 0 : index
    %10 = vector.load %arg3[%c0_6, %c0_7, %c0_8] : memref<4x128x128xbf16, #tpu.memory_space<vmem>>, vector<1x128x128xbf16>
    %11 = vector.shape_cast %10 : vector<1x128x128xbf16> to vector<128x128xbf16>
    %cst_9 = arith.constant dense<0.000000e+00> : vector<8x128xf32>
    %12 = tpu.matmul %9, %11, %cst_9 {dimension_numbers = #tpu.dot_dimension_numbers<[1], [0], [0], [1], [0, 0, 1, 1], [], []>} : vector<8x128xbf16>, vector<128x128xbf16>, vector<8x128xf32> -> vector<8x128xf32>
    %c1 = arith.constant 1 : index
    %c0_10 = arith.constant 0 : index
    %13 = vector.load %arg4[%c1, %c0_10] : memref<5x128xf32, #tpu.memory_space<vmem>>, vector<1x128xf32>
    %14 = vector.broadcast %13 : vector<1x128xf32> to vector<8x128xf32>
    %15 = arith.addf %12, %14 : vector<8x128xf32>
    %cst_11 = arith.constant 0.000000e+00 : f32
    %16 = vector.broadcast %cst_11 : f32 to vector<8x128xf32>
    %17 = arith.maximumf %15, %16 : vector<8x128xf32>
    %18 = arith.truncf %17 : vector<8x128xf32> to vector<8x128xbf16>
    %c1_12 = arith.constant 1 : index
    %c0_13 = arith.constant 0 : index
    %c0_14 = arith.constant 0 : index
    %19 = vector.load %arg3[%c1_12, %c0_13, %c0_14] : memref<4x128x128xbf16, #tpu.memory_space<vmem>>, vector<1x128x128xbf16>
    %20 = vector.shape_cast %19 : vector<1x128x128xbf16> to vector<128x128xbf16>
    %cst_15 = arith.constant dense<0.000000e+00> : vector<8x128xf32>
    %21 = tpu.matmul %18, %20, %cst_15 {dimension_numbers = #tpu.dot_dimension_numbers<[1], [0], [0], [1], [0, 0, 1, 1], [], []>} : vector<8x128xbf16>, vector<128x128xbf16>, vector<8x128xf32> -> vector<8x128xf32>
    %c2 = arith.constant 2 : index
    %c0_16 = arith.constant 0 : index
    %22 = vector.load %arg4[%c2, %c0_16] : memref<5x128xf32, #tpu.memory_space<vmem>>, vector<1x128xf32>
    %23 = vector.broadcast %22 : vector<1x128xf32> to vector<8x128xf32>
    %24 = arith.addf %21, %23 : vector<8x128xf32>
    %cst_17 = arith.constant 0.000000e+00 : f32
    %25 = vector.broadcast %cst_17 : f32 to vector<8x128xf32>
    %26 = arith.maximumf %24, %25 : vector<8x128xf32>
    %27 = arith.truncf %26 : vector<8x128xf32> to vector<8x128xbf16>
    %c2_18 = arith.constant 2 : index
    %c0_19 = arith.constant 0 : index
    %c0_20 = arith.constant 0 : index
    %28 = vector.load %arg3[%c2_18, %c0_19, %c0_20] : memref<4x128x128xbf16, #tpu.memory_space<vmem>>, vector<1x128x128xbf16>
    %29 = vector.shape_cast %28 : vector<1x128x128xbf16> to vector<128x128xbf16>
    %cst_21 = arith.constant dense<0.000000e+00> : vector<8x128xf32>
    %30 = tpu.matmul %27, %29, %cst_21 {dimension_numbers = #tpu.dot_dimension_numbers<[1], [0], [0], [1], [0, 0, 1, 1], [], []>} : vector<8x128xbf16>, vector<128x128xbf16>, vector<8x128xf32> -> vector<8x128xf32>
    %c3 = arith.constant 3 : index
    %c0_22 = arith.constant 0 : index
    %31 = vector.load %arg4[%c3, %c0_22] : memref<5x128xf32, #tpu.memory_space<vmem>>, vector<1x128xf32>
    %32 = vector.broadcast %31 : vector<1x128xf32> to vector<8x128xf32>
    %33 = arith.addf %30, %32 : vector<8x128xf32>
    %cst_23 = arith.constant 0.000000e+00 : f32
    %34 = vector.broadcast %cst_23 : f32 to vector<8x128xf32>
    %35 = arith.maximumf %33, %34 : vector<8x128xf32>
    %36 = arith.truncf %35 : vector<8x128xf32> to vector<8x128xbf16>
    %c3_24 = arith.constant 3 : index
    %c0_25 = arith.constant 0 : index
    %c0_26 = arith.constant 0 : index
    %37 = vector.load %arg3[%c3_24, %c0_25, %c0_26] : memref<4x128x128xbf16, #tpu.memory_space<vmem>>, vector<1x128x128xbf16>
    %38 = vector.shape_cast %37 : vector<1x128x128xbf16> to vector<128x128xbf16>
    %cst_27 = arith.constant dense<0.000000e+00> : vector<8x128xf32>
    %39 = tpu.matmul %36, %38, %cst_27 {dimension_numbers = #tpu.dot_dimension_numbers<[1], [0], [0], [1], [0, 0, 1, 1], [], []>} : vector<8x128xbf16>, vector<128x128xbf16>, vector<8x128xf32> -> vector<8x128xf32>
    %c4 = arith.constant 4 : index
    %c0_28 = arith.constant 0 : index
    %40 = vector.load %arg4[%c4, %c0_28] : memref<5x128xf32, #tpu.memory_space<vmem>>, vector<1x128xf32>
    %41 = vector.broadcast %40 : vector<1x128xf32> to vector<8x128xf32>
    %42 = arith.addf %39, %41 : vector<8x128xf32>
    %43 = arith.truncf %42 : vector<8x128xf32> to vector<8x128xbf16>
    %c0_29 = arith.constant 0 : index
    %c0_30 = arith.constant 0 : index
    %44 = vector.load %arg5[%c0_29, %c0_30] : memref<8x128xbf16, #tpu.memory_space<vmem>>, vector<8x128xbf16>
    tpu.vector_store %arg5[%c0_29, %c0_30], %43 {strides = array<i32>} : memref<8x128xbf16, #tpu.memory_space<vmem>>, vector<8x128xbf16>,
    return
  }
  func.func @transform_0(%arg0: i32) -> (i32, i32) {
    %c0_i32 = arith.constant 0 : i32
    %c0_i32_0 = arith.constant 0 : i32
    return %arg0, %c0_i32 : i32, i32
  }
  func.func @transform_1(%arg0: i32) -> (i32, i32) {
    %c0_i32 = arith.constant 0 : i32
    %c0_i32_0 = arith.constant 0 : i32
    %c0_i32_1 = arith.constant 0 : i32
    return %c0_i32, %c0_i32_0 : i32, i32
  }
  func.func @transform_2(%arg0: i32) -> (i32, i32, i32) {
    %c0_i32 = arith.constant 0 : i32
    %c0_i32_0 = arith.constant 0 : i32
    %c0_i32_1 = arith.constant 0 : i32
    %c0_i32_2 = arith.constant 0 : i32
    return %c0_i32, %c0_i32_0, %c0_i32_1 : i32, i32, i32
  }
  func.func @transform_3(%arg0: i32) -> (i32, i32) {
    %c0_i32 = arith.constant 0 : i32
    %c0_i32_0 = arith.constant 0 : i32
    %c0_i32_1 = arith.constant 0 : i32
    return %c0_i32, %c0_i32_0 : i32, i32
  }
  func.func @transform_4(%arg0: i32) -> (i32, i32) {
    %c0_i32 = arith.constant 0 : i32
    %c0_i32_0 = arith.constant 0 : i32
    return %arg0, %c0_i32 : i32, i32
  }
}

</mosaic_0001>

<llo_original>
// kernel: tpu_custom_call.1
$region0: #{tpu_custom_call.1}
  #allocation0 [shape = 'u32[]', space=smem, size = 0x4, offset = 0x4, fixed_abs, tag = 'smem constant byte address 0x4 - core index']
  #allocation1 [shape = 'u32[72,128]{1,0:T(1,128)}', space=vmem, size = 0x9000, scoped, tag = 'internal scratch']
  %s0 = inlined_call_operand.hbm [shape: f32[8,1000], index: 0, kind: input, shape index: {}]
  %s1 = inlined_call_operand.hbm [shape: bf16[1000,128], index: 1, kind: input, shape index: {}]
  %s2 = inlined_call_operand.hbm [shape: bf16[4,128,128], index: 2, kind: input, shape index: {}]
  %s3 = inlined_call_operand.hbm [shape: f32[5,128], index: 3, kind: input, shape index: {}]
  %s4 = inlined_call_operand.hbm [shape: bf16[8,128], index: 4, kind: output, shape index: {}]
  %s5 = sld [smem:[#allocation0]]
  $region42: #{tpu_custom_call.1} parent=0
    _
  %s7 = ssub.s32 1, %s5
  %s8 = scalar_select 0, %s7, %s5
  $region1: #{tpu_custom_call.1} parent=0
    #allocation2 [shape = 'u8[32768]{0}', space=vmem, size = 0x8000, scoped, tag = 'input window, operand 0, single buffered']
    #allocation3 [shape = 's32[1]{0}', space=sflag, size = 0x4, scoped, tag = 'scoped memory for tpu_custom_call.1']
    #allocation4 [shape = 's32[1]{0}', space=sflag, size = 0x4, scoped, tag = 'scoped memory for tpu_custom_call.1']
    #allocation5 [shape = 'u8[256000]{0}', space=vmem, size = 0x3e800, scoped, tag = 'input window, operand 1, single buffered']
    #allocation6 [shape = 's32[1]{0}', space=sflag, size = 0x4, scoped, tag = 'scoped memory for tpu_custom_call.1']
    #allocation7 [shape = 'u8[131072]{0}', space=vmem, size = 0x20000, scoped, tag = 'input window, operand 2, single buffered']
    #allocation8 [shape = 'u8[4096]{0}', space=vmem, size = 0x1000, scoped, tag = 'input window, operand 3, single buffered']
    #allocation9 [shape = 's32[1]{0}', space=sflag, size = 0x4, scoped, tag = 'scoped memory for tpu_custom_call.1']
    #allocation10 [shape = 'u8[2048]{0}', space=vmem, size = 0x800, scoped, tag = 'output window, operand 0, single buffered']
    %9 = vsyncpa [#allocation3], 0
    %10 = vsyncpa [#allocation6], 0
    %11 = vsyncpa [#allocation9], 0
    %12 = vsyncpa [#allocation4], 0
    // Predicated region
    $region2: #{tpu_custom_call.1} parent=1 // pred_check
      _
    $region3: #{tpu_custom_call.1} parent=1 // pred_check_branch
      %14 = sbr.rel (0) target = $region5
    $region4: #{tpu_custom_call.1} parent=1 // pred_region
      %16 = vsyncadd [#allocation3], 0
      %s18 = sshll.u32 %s0, 4
      %s19 = int_to_ptr.hbm [resolvable:$true] %s18
      %s20 = sshll.u32 [#allocation2], 4
      %s21 = int_to_ptr.vmem [resolvable:$true] %s20
      %23 = dma.hbm_to_vmem [thread:$0]  %s19, 1024, %s21, [#allocation3]
    $region5: #{tpu_custom_call.1} parent=1 // pred_fallthru
      _
    // Predicated region
    $region6: #{tpu_custom_call.1} parent=1 // pred_check
      _
    $region7: #{tpu_custom_call.1} parent=1 // pred_check_branch
      %25 = sbr.rel (0) target = $region9
    $region8: #{tpu_custom_call.1} parent=1 // pred_region
      %27 = vsyncadd [#allocation6], 0
      %s28 = sshll.u32 %s1, 4
      %s29 = int_to_ptr.hbm [resolvable:$true] %s28
      %s30 = sshll.u32 [#allocation5], 4
      %s31 = int_to_ptr.vmem [resolvable:$true] %s30
      %36 = dma.hbm_to_vmem [thread:$0]  %s29, 8000, %s31, [#allocation6], 64, 64, 4
    $region9: #{tpu_custom_call.1} parent=1 // pred_fallthru
      _
    // Predicated region
    $region10: #{tpu_custom_call.1} parent=1 // pred_check
      _
    $region11: #{tpu_custom_call.1} parent=1 // pred_check_branch
      %38 = sbr.rel (0) target = $region13
    $region12: #{tpu_custom_call.1} parent=1 // pred_region
      %40 = vsyncadd [#allocation6], 0
      %s41 = sshll.u32 %s2, 4
      %s42 = int_to_ptr.hbm [resolvable:$true] %s41
      %s43 = sshll.u32 [#allocation7], 4
      %s44 = int_to_ptr.vmem [resolvable:$true] %s43
      %49 = dma.hbm_to_vmem [thread:$0]  %s42, 4096, %s44, [#allocation6], 64, 64, 4
    $region13: #{tpu_custom_call.1} parent=1 // pred_fallthru
      _
    // Predicated region
    $region14: #{tpu_custom_call.1} parent=1 // pred_check
      _
    $region15: #{tpu_custom_call.1} parent=1 // pred_check_branch
      %51 = sbr.rel (0) target = $region17
    $region16: #{tpu_custom_call.1} parent=1 // pred_region
      %53 = vsyncadd [#allocation9], 0
      %s55 = sshll.u32 %s3, 4
      %s56 = int_to_ptr.hbm [resolvable:$true] %s55
      %s57 = sshll.u32 [#allocation8], 4
      %s58 = int_to_ptr.vmem [resolvable:$true] %s57
      %60 = dma.hbm_to_vmem [thread:$0]  %s56, 128, %s58, [#allocation9]
    $region17: #{tpu_custom_call.1} parent=1 // pred_fallthru
      _
    // Predicated region
    $region18: #{tpu_custom_call.1} parent=1 // pred_check
      _
    $region19: #{tpu_custom_call.1} parent=1 // pred_check_branch
      %62 = sbr.rel (0) target = $region21
    $region20: #{tpu_custom_call.1} parent=1 // pred_region
      %64 = dma.done [#allocation3], 1024
    $region21: #{tpu_custom_call.1} parent=1 // pred_fallthru
      _
    // Predicated region
    $region22: #{tpu_custom_call.1} parent=1 // pred_check
      _
    $region23: #{tpu_custom_call.1} parent=1 // pred_check_branch
      %66 = sbr.rel (0) target = $region25
    $region24: #{tpu_custom_call.1} parent=1 // pred_region
      %68 = dma.done [#allocation6], 8000
    $region25: #{tpu_custom_call.1} parent=1 // pred_fallthru
      _
    // Predicated region
    $region26: #{tpu_custom_call.1} parent=1 // pred_check
      _
    $region27: #{tpu_custom_call.1} parent=1 // pred_check_branch
      %70 = sbr.rel (0) target = $region29
    $region28: #{tpu_custom_call.1} parent=1 // pred_region
      %72 = dma.done [#allocation6], 4096
    $region29: #{tpu_custom_call.1} parent=1 // pred_fallthru
      _
    // Predicated region
    $region30: #{tpu_custom_call.1} parent=1 // pred_check
      _
    $region31: #{tpu_custom_call.1} parent=1 // pred_check_branch
      %74 = sbr.rel (0) target = $region33
    $region32: #{tpu_custom_call.1} parent=1 // pred_region
      %76 = dma.done [#allocation9], 128
    $region33: #{tpu_custom_call.1} parent=1 // pred_fallthru
      _
    %v78 = vld [vmem:[#allocation2] sm:$0xff]
    %v79 = vld [vmem:[#allocation2 + $0x8] sm:$0xff]
    %v80 = vld [vmem:[#allocation2 + $0x10] sm:$0xff]
    %v81 = vld [vmem:[#allocation2 + $0x18] sm:$0xff]
    %v82 = vld [vmem:[#allocation2 + $0x20] sm:$0xff]
    %v83 = vld [vmem:[#allocation2 + $0x28] sm:$0xff]
    %v84 = vld [vmem:[#allocation2 + $0x30] sm:$0xff]
    %v85 = vld [vmem:[#allocation2 + $0x38] sm:$0xff]
    %v86 = vpack.c.bf16 %v78, %v78
    %v87 = vpack.c.bf16 %v79, %v79
    %v88 = vpack.c.bf16 %v80, %v80
    %v89 = vpack.c.bf16 %v81, %v81
    %v90 = vpack.c.bf16 %v82, %v82
    %v91 = vpack.c.bf16 %v83, %v83
    %v92 = vpack.c.bf16 %v84, %v84
    %v93 = vpack.c.bf16 %v85, %v85
    %v94 = vld [vmem:[#allocation5] sm:$0xf]
    %v95 = vld [vmem:[#allocation5 + $0x4] sm:$0xf]
    %v96 = vld [vmem:[#allocation5 + $0x8] sm:$0xf]
    %v97 = vld [vmem:[#allocation5 + $0xc] sm:$0xf]
    %v98 = vld [vmem:[#allocation5 + $0x10] sm:$0xf]
    %v99 = vld [vmem:[#allocation5 + $0x14] sm:$0xf]
    %v100 = vld [vmem:[#allocation5 + $0x18] sm:$0xf]
    %v101 = vld [vmem:[#allocation5 + $0x1c] sm:$0xf]
    %v102 = vld [vmem:[#allocation5 + $0x20] sm:$0xf]
    %v103 = vld [vmem:[#allocation5 + $0x24] sm:$0xf]
    %v104 = vld [vmem:[#allocation5 + $0x28] sm:$0xf]
    %v105 = vld [vmem:[#allocation5 + $0x2c] sm:$0xf]
    %v106 = vld [vmem:[#allocation5 + $0x30] sm:$0xf]
    %v107 = vld [vmem:[#allocation5 + $0x34] sm:$0xf]
    %v108 = vld [vmem:[#allocation5 + $0x38] sm:$0xf]
    %v109 = vld [vmem:[#allocation5 + $0x3c] sm:$0xf]
    %v110 = vld [vmem:[#allocation5 + $0x40] sm:$0xf]
    %v111 = vld [vmem:[#allocation5 + $0x44] sm:$0xf]
    %v112 = vld [vmem:[#allocation5 + $0x48] sm:$0xf]
    %v113 = vld [vmem:[#allocation5 + $0x4c] sm:$0xf]
    %v114 = vld [vmem:[#allocation5 + $0x50] sm:$0xf]
    %v115 = vld [vmem:[#allocation5 + $0x54] sm:$0xf]
    %v116 = vld [vmem:[#allocation5 + $0x58] sm:$0xf]
    %v117 = vld [vmem:[#allocation5 + $0x5c] sm:$0xf]
    %v118 = vld [vmem:[#allocation5 + $0x60] sm:$0xf]
    %v119 = vld [vmem:[#allocation5 + $0x64] sm:$0xf]
    %v120 = vld [vmem:[#allocation5 + $0x68] sm:$0xf]
    %v121 = vld [vmem:[#allocation5 + $0x6c] sm:$0xf]
    %v122 = vld [vmem:[#allocation5 + $0x70] sm:$0xf]
    %v123 = vld [vmem:[#allocation5 + $0x74] sm:$0xf]
    %v124 = vld [vmem:[#allocation5 + $0x78] sm:$0xf]
    %v125 = vld [vmem:[#allocation5 + $0x7c] sm:$0xf]
    %v126 = vld [vmem:[#allocation5 + $0x80] sm:$0xf]
    %v127 = vld [vmem:[#allocation5 + $0x84] sm:$0xf]
    %v128 = vld [vmem:[#allocation5 + $0x88] sm:$0xf]
    %v129 = vld [vmem:[#allocation5 + $0x8c] sm:$0xf]
    %v130 = vld [vmem:[#allocation5 + $0x90] sm:$0xf]
    %v131 = vld [vmem:[#allocation5 + $0x94] sm:$0xf]
    %v132 = vld [vmem:[#allocation5 + $0x98] sm:$0xf]
    %v133 = vld [vmem:[#allocation5 + $0x9c] sm:$0xf]
    %v134 = vld [vmem:[#allocation5 + $0xa0] sm:$0xf]
    %v135 = vld [vmem:[#allocation5 + $0xa4] sm:$0xf]
    %v136 = vld [vmem:[#allocation5 + $0xa8] sm:$0xf]
    %v137 = vld [vmem:[#allocation5 + $0xac] sm:$0xf]
    %v138 = vld [vmem:[#allocation5 + $0xb0] sm:$0xf]
    %v139 = vld [vmem:[#allocation5 + $0xb4] sm:$0xf]
    %v140 = vld [vmem:[#allocation5 + $0xb8] sm:$0xf]
    %v141 = vld [vmem:[#allocation5 + $0xbc] sm:$0xf]
    %v142 = vld [vmem:[#allocation5 + $0xc0] sm:$0xf]
    %v143 = vld [vmem:[#allocation5 + $0xc4] sm:$0xf]
    %v144 = vld [vmem:[#allocation5 + $0xc8] sm:$0xf]
    %v145 = vld [vmem:[#allocation5 + $0xcc] sm:$0xf]
    %v146 = vld [vmem:[#allocation5 + $0xd0] sm:$0xf]
    %v147 = vld [vmem:[#allocation5 + $0xd4] sm:$0xf]
    %v148 = vld [vmem:[#allocation5 + $0xd8] sm:$0xf]
    %v149 = vld [vmem:[#allocation5 + $0xdc] sm:$0xf]
    %v150 = vld [vmem:[#allocation5 + $0xe0] sm:$0xf]
    %v151 = vld [vmem:[#allocation5 + $0xe4] sm:$0xf]
    %v152 = vld [vmem:[#allocation5 + $0xe8] sm:$0xf]
    %v153 = vld [vmem:[#allocation5 + $0xec] sm:$0xf]
    %v154 = vld [vmem:[#allocation5 + $0xf0] sm:$0xf]
    %v155 = vld [vmem:[#allocation5 + $0xf4] sm:$0xf]
    %v156 = vld [vmem:[#allocation5 + $0xf8] sm:$0xf]
    %v157 = vld [vmem:[#allocation5 + $0xfc] sm:$0xf]
    %v158 = vld [vmem:[#allocation5 + $0x100] sm:$0xf]
    %v159 = vld [vmem:[#allocation5 + $0x104] sm:$0xf]
    %v160 = vld [vmem:[#allocation5 + $0x108] sm:$0xf]
    %v161 = vld [vmem:[#allocation5 + $0x10c] sm:$0xf]
    %v162 = vld [vmem:[#allocation5 + $0x110] sm:$0xf]
    %v163 = vld [vmem:[#allocation5 + $0x114] sm:$0xf]
    %v164 = vld [vmem:[#allocation5 + $0x118] sm:$0xf]
    %v165 = vld [vmem:[#allocation5 + $0x11c] sm:$0xf]
    %v166 = vld [vmem:[#allocation5 + $0x120] sm:$0xf]
    %v167 = vld [vmem:[#allocation5 + $0x124] sm:$0xf]
    %v168 = vld [vmem:[#allocation5 + $0x128] sm:$0xf]
    %v169 = vld [vmem:[#allocation5 + $0x12c] sm:$0xf]
    %v170 = vld [vmem:[#allocation5 + $0x130] sm:$0xf]
    %v171 = vld [vmem:[#allocation5 + $0x134] sm:$0xf]
    %v172 = vld [vmem:[#allocation5 + $0x138] sm:$0xf]
    %v173 = vld [vmem:[#allocation5 + $0x13c] sm:$0xf]
    %v174 = vld [vmem:[#allocation5 + $0x140] sm:$0xf]
    %v175 = vld [vmem:[#allocation5 + $0x144] sm:$0xf]
    %v176 = vld [vmem:[#allocation5 + $0x148] sm:$0xf]
    %v177 = vld [vmem:[#allocation5 + $0x14c] sm:$0xf]
    %v178 = vld [vmem:[#allocation5 + $0x150] sm:$0xf]
    %v179 = vld [vmem:[#allocation5 + $0x154] sm:$0xf]
    %v180 = vld [vmem:[#allocation5 + $0x158] sm:$0xf]
    %v181 = vld [vmem:[#allocation5 + $0x15c] sm:$0xf]
    %v182 = vld [vmem:[#allocation5 + $0x160] sm:$0xf]
    %v183 = vld [vmem:[#allocation5 + $0x164] sm:$0xf]
    %v184 = vld [vmem:[#allocation5 + $0x168] sm:$0xf]
    %v185 = vld [vmem:[#allocation5 + $0x16c] sm:$0xf]
    %v186 = vld [vmem:[#allocation5 + $0x170] sm:$0xf]
    %v187 = vld [vmem:[#allocation5 + $0x174] sm:$0xf]
    %v188 = vld [vmem:[#allocation5 + $0x178] sm:$0xf]
    %v189 = vld [vmem:[#allocation5 + $0x17c] sm:$0xf]
    %v190 = vld [vmem:[#allocation5 + $0x180] sm:$0xf]
    %v191 = vld [vmem:[#allocation5 + $0x184] sm:$0xf]
    %v192 = vld [vmem:[#allocation5 + $0x188] sm:$0xf]
    %v193 = vld [vmem:[#allocation5 + $0x18c] sm:$0xf]
    %v194 = vld [vmem:[#allocation5 + $0x190] sm:$0xf]
    %v195 = vld [vmem:[#allocation5 + $0x194] sm:$0xf]
    %v196 = vld [vmem:[#allocation5 + $0x198] sm:$0xf]
    %v197 = vld [vmem:[#allocation5 + $0x19c] sm:$0xf]
    %v198 = vld [vmem:[#allocation5 + $0x1a0] sm:$0xf]
    %v199 = vld [vmem:[#allocation5 + $0x1a4] sm:$0xf]
    %v200 = vld [vmem:[#allocation5 + $0x1a8] sm:$0xf]
    %v201 = vld [vmem:[#allocation5 + $0x1ac] sm:$0xf]
    %v202 = vld [vmem:[#allocation5 + $0x1b0] sm:$0xf]
    %v203 = vld [vmem:[#allocation5 + $0x1b4] sm:$0xf]
    %v204 = vld [vmem:[#allocation5 + $0x1b8] sm:$0xf]
    %v205 = vld [vmem:[#allocation5 + $0x1bc] sm:$0xf]
    %v206 = vld [vmem:[#allocation5 + $0x1c0] sm:$0xf]
    %v207 = vld [vmem:[#allocation5 + $0x1c4] sm:$0xf]
    %v208 = vld [vmem:[#allocation5 + $0x1c8] sm:$0xf]
    %v209 = vld [vmem:[#allocation5 + $0x1cc] sm:$0xf]
    %v210 = vld [vmem:[#allocation5 + $0x1d0] sm:$0xf]
    %v211 = vld [vmem:[#allocation5 + $0x1d4] sm:$0xf]
    %v212 = vld [vmem:[#allocation5 + $0x1d8] sm:$0xf]
    %v213 = vld [vmem:[#allocation5 + $0x1dc] sm:$0xf]
    %v214 = vld [vmem:[#allocation5 + $0x1e0] sm:$0xf]
    %v215 = vld [vmem:[#allocation5 + $0x1e4] sm:$0xf]
    %v216 = vld [vmem:[#allocation5 + $0x1e8] sm:$0xf]
    %v217 = vld [vmem:[#allocation5 + $0x1ec] sm:$0xf]
    %v218 = vld [vmem:[#allocation5 + $0x1f0] sm:$0xf]
    %v219 = vld [vmem:[#allocation8] sm:$0x1]
    %v220 = vperm.slane %v219, 0
    %v346 = vunpack.c.l.b16 %v94
    %v347 = vunpack.c.l.b16 %v95
    %v348 = vunpack.c.l.b16 %v96
    %v349 = vunpack.c.l.b16 %v97
    %v350 = vunpack.c.l.b16 %v98
    %v351 = vunpack.c.l.b16 %v99
    %v352 = vunpack.c.l.b16 %v100
    %v353 = vunpack.c.l.b16 %v101
    %v354 = vunpack.c.l.b16 %v102
    %v355 = vunpack.c.l.b16 %v103
    %v356 = vunpack.c.l.b16 %v104
    %v357 = vunpack.c.l.b16 %v105
    %v358 = vunpack.c.l.b16 %v106
    %v359 = vunpack.c.l.b16 %v107
    %v360 = vunpack.c.l.b16 %v108
    %v361 = vunpack.c.l.b16 %v109
    %v362 = vunpack.c.l.b16 %v110
    %v363 = vunpack.c.l.b16 %v111
    %v364 = vunpack.c.l.b16 %v112
    %v365 = vunpack.c.l.b16 %v113
    %v366 = vunpack.c.l.b16 %v114
    %v367 = vunpack.c.l.b16 %v115
    %v368 = vunpack.c.l.b16 %v116
    %v369 = vunpack.c.l.b16 %v117
    %v370 = vunpack.c.l.b16 %v118
    %v371 = vunpack.c.l.b16 %v119
    %v372 = vunpack.c.l.b16 %v120
    %v373 = vunpack.c.l.b16 %v121
    %v374 = vunpack.c.l.b16 %v122
    %v375 = vunpack.c.l.b16 %v123
    %v376 = vunpack.c.l.b16 %v124
    %v377 = vunpack.c.l.b16 %v125
    %v378 = vunpack.c.l.b16 %v126
    %v379 = vunpack.c.l.b16 %v127
    %v380 = vunpack.c.l.b16 %v128
    %v381 = vunpack.c.l.b16 %v129
    %v382 = vunpack.c.l.b16 %v130
    %v383 = vunpack.c.l.b16 %v131
    %v384 = vunpack.c.l.b16 %v132
    %v385 = vunpack.c.l.b16 %v133
    %v386 = vunpack.c.l.b16 %v134
    %v387 = vunpack.c.l.b16 %v135
    %v388 = vunpack.c.l.b16 %v136
    %v389 = vunpack.c.l.b16 %v137
    %v390 = vunpack.c.l.b16 %v138
    %v391 = vunpack.c.l.b16 %v139
    %v392 = vunpack.c.l.b16 %v140
    %v393 = vunpack.c.l.b16 %v141
    %v394 = vunpack.c.l.b16 %v142
    %v395 = vunpack.c.l.b16 %v143
    %v396 = vunpack.c.l.b16 %v144
    %v397 = vunpack.c.l.b16 %v145
    %v398 = vunpack.c.l.b16 %v146
    %v399 = vunpack.c.l.b16 %v147
    %v400 = vunpack.c.l.b16 %v148
    %v401 = vunpack.c.l.b16 %v149
    %v402 = vunpack.c.l.b16 %v150
    %v403 = vunpack.c.l.b16 %v151
    %v404 = vunpack.c.l.b16 %v152
    %v405 = vunpack.c.l.b16 %v153
    %v406 = vunpack.c.l.b16 %v154
    %v407 = vunpack.c.l.b16 %v155
    %v408 = vunpack.c.l.b16 %v156
    %v409 = vunpack.c.l.b16 %v157
    %v410 = vunpack.c.l.b16 %v158
    %v411 = vunpack.c.l.b16 %v159
    %v412 = vunpack.c.l.b16 %v160
    %v413 = vunpack.c.l.b16 %v161
    %v414 = vunpack.c.l.b16 %v162
    %v415 = vunpack.c.l.b16 %v163
    %v416 = vunpack.c.l.b16 %v164
    %v417 = vunpack.c.l.b16 %v165
    %v418 = vunpack.c.l.b16 %v166
    %v419 = vunpack.c.l.b16 %v167
    %v420 = vunpack.c.l.b16 %v168
    %v421 = vunpack.c.l.b16 %v169
    %v422 = vunpack.c.l.b16 %v170
    %v423 = vunpack.c.l.b16 %v171
    %v424 = vunpack.c.l.b16 %v172
    %v425 = vunpack.c.l.b16 %v173
    %v426 = vunpack.c.l.b16 %v174
    %v427 = vunpack.c.l.b16 %v175
    %v428 = vunpack.c.l.b16 %v176
    %v429 = vunpack.c.l.b16 %v177
    %v430 = vunpack.c.l.b16 %v178
    %v431 = vunpack.c.l.b16 %v179
    %v432 = vunpack.c.l.b16 %v180
    %v433 = vunpack.c.l.b16 %v181
    %v434 = vunpack.c.l.b16 %v182
    %v435 = vunpack.c.l.b16 %v183
    %v436 = vunpack.c.l.b16 %v184
    %v437 = vunpack.c.l.b16 %v185
    %v438 = vunpack.c.l.b16 %v186
    %v439 = vunpack.c.l.b16 %v187
    %v440 = vunpack.c.l.b16 %v188
    %v441 = vunpack.c.l.b16 %v189
    %v442 = vunpack.c.l.b16 %v190
    %v443 = vunpack.c.l.b16 %v191
    %v444 = vunpack.c.l.b16 %v192
    %v445 = vunpack.c.l.b16 %v193
    %v446 = vunpack.c.l.b16 %v194
    %v447 = vunpack.c.l.b16 %v195
    %v448 = vunpack.c.l.b16 %v196
    %v449 = vunpack.c.l.b16 %v197
    %v450 = vunpack.c.l.b16 %v198
    %v451 = vunpack.c.l.b16 %v199
    %v452 = vunpack.c.l.b16 %v200
    %v453 = vunpack.c.l.b16 %v201
    %v454 = vunpack.c.l.b16 %v202
    %v455 = vunpack.c.l.b16 %v203
    %v456 = vunpack.c.l.b16 %v204
    %v457 = vunpack.c.l.b16 %v205
    %v458 = vunpack.c.l.b16 %v206
    %v459 = vunpack.c.l.b16 %v207
    %v460 = vunpack.c.l.b16 %v208
    %v461 = vunpack.c.l.b16 %v209
    %v462 = vunpack.c.l.b16 %v210
    %v463 = vunpack.c.l.b16 %v211
    %v464 = vunpack.c.l.b16 %v212
    %v465 = vunpack.c.l.b16 %v213
    %v466 = vunpack.c.l.b16 %v214
    %v467 = vunpack.c.l.b16 %v215
    %v468 = vunpack.c.l.b16 %v216
    %v469 = vunpack.c.l.b16 %v217
    %v470 = vunpack.c.l.b16 %v218
    %v471 = vpack.c.b16 %v347, %v346
    %v472 = vpack.c.b16 %v349, %v348
    %v473 = vpack.c.b16 %v351, %v350
    %v474 = vpack.c.b16 %v353, %v352
    %v475 = vpack.c.b16 %v355, %v354
    %v476 = vpack.c.b16 %v357, %v356
    %v477 = vpack.c.b16 %v359, %v358
    %v478 = vpack.c.b16 %v361, %v360
    %v479 = vpack.c.b16 %v363, %v362
    %v480 = vpack.c.b16 %v365, %v364
    %v481 = vpack.c.b16 %v367, %v366
    %v482 = vpack.c.b16 %v369, %v368
    %v483 = vpack.c.b16 %v371, %v370
    %v484 = vpack.c.b16 %v373, %v372
    %v485 = vpack.c.b16 %v375, %v374
    %v486 = vpack.c.b16 %v377, %v376
    %v487 = vpack.c.b16 %v379, %v378
    %v488 = vpack.c.b16 %v381, %v380
    %v489 = vpack.c.b16 %v383, %v382
    %v490 = vpack.c.b16 %v385, %v384
    %v491 = vpack.c.b16 %v387, %v386
    %v492 = vpack.c.b16 %v389, %v388
    %v493 = vpack.c.b16 %v391, %v390
    %v494 = vpack.c.b16 %v393, %v392
    %v495 = vpack.c.b16 %v395, %v394
    %v496 = vpack.c.b16 %v397, %v396
    %v497 = vpack.c.b16 %v399, %v398
    %v498 = vpack.c.b16 %v401, %v400
    %v499 = vpack.c.b16 %v403, %v402
    %v500 = vpack.c.b16 %v405, %v404
    %v501 = vpack.c.b16 %v407, %v406
    %v502 = vpack.c.b16 %v409, %v408
    %v503 = vpack.c.b16 %v411, %v410
    %v504 = vpack.c.b16 %v413, %v412
    %v505 = vpack.c.b16 %v415, %v414
    %v506 = vpack.c.b16 %v417, %v416
    %v507 = vpack.c.b16 %v419, %v418
    %v508 = vpack.c.b16 %v421, %v420
    %v509 = vpack.c.b16 %v423, %v422
    %v510 = vpack.c.b16 %v425, %v424
    %v511 = vpack.c.b16 %v427, %v426
    %v512 = vpack.c.b16 %v429, %v428
    %v513 = vpack.c.b16 %v431, %v430
    %v514 = vpack.c.b16 %v433, %v432
    %v515 = vpack.c.b16 %v435, %v434
    %v516 = vpack.c.b16 %v437, %v436
    %v517 = vpack.c.b16 %v439, %v438
    %v518 = vpack.c.b16 %v441, %v440
    %v519 = vpack.c.b16 %v443, %v442
    %v520 = vpack.c.b16 %v445, %v444
    %v521 = vpack.c.b16 %v447, %v446
    %v522 = vpack.c.b16 %v449, %v448
    %v523 = vpack.c.b16 %v451, %v450
    %v524 = vpack.c.b16 %v453, %v452
    %v525 = vpack.c.b16 %v455, %v454
    %v526 = vpack.c.b16 %v457, %v456
    %v527 = vpack.c.b16 %v459, %v458
    %v528 = vpack.c.b16 %v461, %v460
    %v529 = vpack.c.b16 %v463, %v462
    %v530 = vpack.c.b16 %v465, %v464
    %v531 = vpack.c.b16 %v467, %v466
    %v532 = vpack.c.b16 %v469, %v468
    %v533 = vpack.c.b16 %v470, %v470
    %vm596 = vcmask 850944
    %v598 = vsel %vm596, %v93, 0
    %vm600 = vcmask 1043456
    %v602 = vsel %vm600, %v533, 0
    %604 = vmatpush.bf16.msra.mxu0 %v478
    %605 = vmatpush.bf16.msra.mxu0 %v477
    %606 = vmatpush.bf16.msra.mxu0 %v476
    %607 = vmatpush.bf16.msra.mxu0 %v475
    %608 = vmatpush.bf16.msra.mxu0 %v474
    %609 = vmatpush.bf16.msra.mxu0 %v473
    %610 = vmatpush.bf16.msra.mxu0 %v472
    %611 = vmatpush.bf16.msra.mxu0 %v471
    %612 = vmatmul.bf16.gmra.mxu0 %v86
    %v613 = vpop.f32.mrf.mxu0
    %v614 = vadd.f32 %v220, %v613
    %v615 = vpop.f32.mrf.mxu0
    %616 = vdwg.mxu0
    %617 = vmatpush.bf16.msra.mxu0 %v486
    %618 = vmatpush.bf16.msra.mxu0 %v485
    %619 = vmatpush.bf16.msra.mxu0 %v484
    %620 = vmatpush.bf16.msra.mxu0 %v483
    %621 = vmatpush.bf16.msra.mxu0 %v482
    %622 = vmatpush.bf16.msra.mxu0 %v481
    %623 = vmatpush.bf16.msra.mxu0 %v480
    %624 = vmatpush.bf16.msra.mxu0 %v479
    %625 = vmatmul.bf16.gmra.mxu0 %v87
    %v626 = vpop.f32.mrf.mxu0
    %v627 = vadd.f32 %v614, %v626
    %v628 = vpop.f32.mrf.mxu0
    %629 = vdwg.mxu0
    %630 = vmatpush.bf16.msra.mxu0 %v494
    %631 = vmatpush.bf16.msra.mxu0 %v493
    %632 = vmatpush.bf16.msra.mxu0 %v492
    %633 = vmatpush.bf16.msra.mxu0 %v491
    %634 = vmatpush.bf16.msra.mxu0 %v490
    %635 = vmatpush.bf16.msra.mxu0 %v489
    %636 = vmatpush.bf16.msra.mxu0 %v488
    %637 = vmatpush.bf16.msra.mxu0 %v487
    %638 = vmatmul.bf16.gmra.mxu0 %v88
    %v639 = vpop.f32.mrf.mxu0
    %v640 = vadd.f32 %v627, %v639
    %v641 = vpop.f32.mrf.mxu0
    %642 = vdwg.mxu0
    %643 = vmatpush.bf16.msra.mxu0 %v502
    %644 = vmatpush.bf16.msra.mxu0 %v501
    %645 = vmatpush.bf16.msra.mxu0 %v500
    %646 = vmatpush.bf16.msra.mxu0 %v499
    %647 = vmatpush.bf16.msra.mxu0 %v498
    %648 = vmatpush.bf16.msra.mxu0 %v497
    %649 = vmatpush.bf16.msra.mxu0 %v496
    %650 = vmatpush.bf16.msra.mxu0 %v495
    %651 = vmatmul.bf16.gmra.mxu0 %v89
    %v652 = vpop.f32.mrf.mxu0
    %v653 = vadd.f32 %v640, %v652
    %v654 = vpop.f32.mrf.mxu0
    %655 = vdwg.mxu0
    %656 = vmatpush.bf16.msra.mxu0 %v510
    %657 = vmatpush.bf16.msra.mxu0 %v509
    %658 = vmatpush.bf16.msra.mxu0 %v508
    %659 = vmatpush.bf16.msra.mxu0 %v507
    %660 = vmatpush.bf16.msra.mxu0 %v506
    %661 = vmatpush.bf16.msra.mxu0 %v505
    %662 = vmatpush.bf16.msra.mxu0 %v504
    %663 = vmatpush.bf16.msra.mxu0 %v503
    %664 = vmatmul.bf16.gmra.mxu0 %v90
    %v665 = vpop.f32.mrf.mxu0
    %v666 = vadd.f32 %v653, %v665
    %v667 = vpop.f32.mrf.mxu0
    %668 = vdwg.mxu0
    %669 = vmatpush.bf16.msra.mxu0 %v518
    %670 = vmatpush.bf16.msra.mxu0 %v517
    %671 = vmatpush.bf16.msra.mxu0 %v516
    %672 = vmatpush.bf16.msra.mxu0 %v515
    %673 = vmatpush.bf16.msra.mxu0 %v514
    %674 = vmatpush.bf16.msra.mxu0 %v513
    %675 = vmatpush.bf16.msra.mxu0 %v512
    %676 = vmatpush.bf16.msra.mxu0 %v511
    %677 = vmatmul.bf16.gmra.mxu0 %v91
    %v678 = vpop.f32.mrf.mxu0
    %v679 = vadd.f32 %v666, %v678
    %v680 = vpop.f32.mrf.mxu0
    %681 = vdwg.mxu0
    %682 = vmatpush.bf16.msra.mxu0 %v526
    %683 = vmatpush.bf16.msra.mxu0 %v525
    %684 = vmatpush.bf16.msra.mxu0 %v524
    %685 = vmatpush.bf16.msra.mxu0 %v523
    %686 = vmatpush.bf16.msra.mxu0 %v522
    %687 = vmatpush.bf16.msra.mxu0 %v521
    %688 = vmatpush.bf16.msra.mxu0 %v520
    %689 = vmatpush.bf16.msra.mxu0 %v519
    %690 = vmatmul.bf16.gmra.mxu0 %v92
    %v691 = vpop.f32.mrf.mxu0
    %v692 = vadd.f32 %v679, %v691
    %v693 = vpop.f32.mrf.mxu0
    %694 = vdwg.mxu0
    %695 = vmatpush.bf16.msra.mxu0 0
    %696 = vmatpush.bf16.msra.mxu0 %v602
    %697 = vmatpush.bf16.msra.mxu0 %v532
    %698 = vmatpush.bf16.msra.mxu0 %v531
    %699 = vmatpush.bf16.msra.mxu0 %v530
    %700 = vmatpush.bf16.msra.mxu0 %v529
    %701 = vmatpush.bf16.msra.mxu0 %v528
    %702 = vmatpush.bf16.msra.mxu0 %v527
    %703 = vmatmul.bf16.gmra.mxu0 %v598
    %v704 = vpop.f32.mrf.mxu0
    %v705 = vadd.f32 %v692, %v704
    %v706 = vpop.f32.mrf.mxu0
    %707 = vdwg.mxu0
    %v708 = vmax.f32 %v705, 0.0
    %v709 = vpack.c.bf16 %v708, %v708
    %v710 = vld [vmem:[#allocation7] sm:$0xf]
    %v711 = vld [vmem:[#allocation7 + $0x4] sm:$0xf]
    %v712 = vld [vmem:[#allocation7 + $0x8] sm:$0xf]
    %v713 = vld [vmem:[#allocation7 + $0xc] sm:$0xf]
    %v714 = vld [vmem:[#allocation7 + $0x10] sm:$0xf]
    %v715 = vld [vmem:[#allocation7 + $0x14] sm:$0xf]
    %v716 = vld [vmem:[#allocation7 + $0x18] sm:$0xf]
    %v717 = vld [vmem:[#allocation7 + $0x1c] sm:$0xf]
    %v718 = vld [vmem:[#allocation7 + $0x20] sm:$0xf]
    %v719 = vld [vmem:[#allocation7 + $0x24] sm:$0xf]
    %v720 = vld [vmem:[#allocation7 + $0x28] sm:$0xf]
    %v721 = vld [vmem:[#allocation7 + $0x2c] sm:$0xf]
    %v722 = vld [vmem:[#allocation7 + $0x30] sm:$0xf]
    %v723 = vld [vmem:[#allocation7 + $0x34] sm:$0xf]
    %v724 = vld [vmem:[#allocation7 + $0x38] sm:$0xf]
    %v725 = vld [vmem:[#allocation7 + $0x3c] sm:$0xf]
    %v726 = vld [vmem:[#allocation8 + $0x1] sm:$0x1]
    %v727 = vperm.slane %v726, 0
    %v744 = vunpack.c.l.b16 %v710
    %v745 = vunpack.c.l.b16 %v711
    %v746 = vunpack.c.l.b16 %v712
    %v747 = vunpack.c.l.b16 %v713
    %v748 = vunpack.c.l.b16 %v714
    %v749 = vunpack.c.l.b16 %v715
    %v750 = vunpack.c.l.b16 %v716
    %v751 = vunpack.c.l.b16 %v717
    %v752 = vunpack.c.l.b16 %v718
    %v753 = vunpack.c.l.b16 %v719
    %v754 = vunpack.c.l.b16 %v720
    %v755 = vunpack.c.l.b16 %v721
    %v756 = vunpack.c.l.b16 %v722
    %v757 = vunpack.c.l.b16 %v723
    %v758 = vunpack.c.l.b16 %v724
    %v759 = vunpack.c.l.b16 %v725
    %v760 = vpack.c.b16 %v745, %v744
    %v761 = vpack.c.b16 %v747, %v746
    %v762 = vpack.c.b16 %v749, %v748
    %v763 = vpack.c.b16 %v751, %v750
    %v764 = vpack.c.b16 %v753, %v752
    %v765 = vpack.c.b16 %v755, %v754
    %v766 = vpack.c.b16 %v757, %v756
    %v767 = vpack.c.b16 %v759, %v758
    %776 = vmatpush.bf16.msra.mxu0 %v767
    %777 = vmatpush.bf16.msra.mxu0 %v766
    %778 = vmatpush.bf16.msra.mxu0 %v765
    %779 = vmatpush.bf16.msra.mxu0 %v764
    %780 = vmatpush.bf16.msra.mxu0 %v763
    %781 = vmatpush.bf16.msra.mxu0 %v762
    %782 = vmatpush.bf16.msra.mxu0 %v761
    %783 = vmatpush.bf16.msra.mxu0 %v760
    %784 = vmatmul.bf16.gmra.mxu0 %v709
    %v785 = vpop.f32.mrf.mxu0
    %v786 = vadd.f32 %v727, %v785
    %v787 = vpop.f32.mrf.mxu0
    %788 = vdwg.mxu0
    %v789 = vmax.f32 %v786, 0.0
    %v790 = vpack.c.bf16 %v789, %v789
    %s791 = scalar_lea.vmem [#allocation7], 64
    %v792 = vld [vmem:[%s791] sm:$0xf]
    %v793 = vld [vmem:[%s791 + $0x4] sm:$0xf]
    %v794 = vld [vmem:[%s791 + $0x8] sm:$0xf]
    %v795 = vld [vmem:[%s791 + $0xc] sm:$0xf]
    %v796 = vld [vmem:[%s791 + $0x10] sm:$0xf]
    %v797 = vld [vmem:[%s791 + $0x14] sm:$0xf]
    %v798 = vld [vmem:[%s791 + $0x18] sm:$0xf]
    %v799 = vld [vmem:[%s791 + $0x1c] sm:$0xf]
    %v800 = vld [vmem:[%s791 + $0x20] sm:$0xf]
    %v801 = vld [vmem:[%s791 + $0x24] sm:$0xf]
    %v802 = vld [vmem:[%s791 + $0x28] sm:$0xf]
    %v803 = vld [vmem:[%s791 + $0x2c] sm:$0xf]
    %v804 = vld [vmem:[%s791 + $0x30] sm:$0xf]
    %v805 = vld [vmem:[%s791 + $0x34] sm:$0xf]
    %v806 = vld [vmem:[%s791 + $0x38] sm:$0xf]
    %v807 = vld [vmem:[%s791 + $0x3c] sm:$0xf]
    %v808 = vld [vmem:[#allocation8 + $0x2] sm:$0x1]
    %v809 = vperm.slane %v808, 0
    %v826 = vunpack.c.l.b16 %v792
    %v827 = vunpack.c.l.b16 %v793
    %v828 = vunpack.c.l.b16 %v794
    %v829 = vunpack.c.l.b16 %v795
    %v830 = vunpack.c.l.b16 %v796
    %v831 = vunpack.c.l.b16 %v797
    %v832 = vunpack.c.l.b16 %v798
    %v833 = vunpack.c.l.b16 %v799
    %v834 = vunpack.c.l.b16 %v800
    %v835 = vunpack.c.l.b16 %v801
    %v836 = vunpack.c.l.b16 %v802
    %v837 = vunpack.c.l.b16 %v803
    %v838 = vunpack.c.l.b16 %v804
    %v839 = vunpack.c.l.b16 %v805
    %v840 = vunpack.c.l.b16 %v806
    %v841 = vunpack.c.l.b16 %v807
    %v842 = vpack.c.b16 %v827, %v826
    %v843 = vpack.c.b16 %v829, %v828
    %v844 = vpack.c.b16 %v831, %v830
    %v845 = vpack.c.b16 %v833, %v832
    %v846 = vpack.c.b16 %v835, %v834
    %v847 = vpack.c.b16 %v837, %v836
    %v848 = vpack.c.b16 %v839, %v838
    %v849 = vpack.c.b16 %v841, %v840
    %858 = vmatpush.bf16.msra.mxu0 %v849
    %859 = vmatpush.bf16.msra.mxu0 %v848
    %860 = vmatpush.bf16.msra.mxu0 %v847
    %861 = vmatpush.bf16.msra.mxu0 %v846
    %862 = vmatpush.bf16.msra.mxu0 %v845
    %863 = vmatpush.bf16.msra.mxu0 %v844
    %864 = vmatpush.bf16.msra.mxu0 %v843
    %865 = vmatpush.bf16.msra.mxu0 %v842
    %866 = vmatmul.bf16.gmra.mxu0 %v790
    %v867 = vpop.f32.mrf.mxu0
    %v868 = vadd.f32 %v809, %v867
    %v869 = vpop.f32.mrf.mxu0
    %870 = vdwg.mxu0
    %v871 = vmax.f32 %v868, 0.0
    %v872 = vpack.c.bf16 %v871, %v871
    %s873 = scalar_lea.vmem [#allocation7], 128
    %v874 = vld [vmem:[%s873] sm:$0xf]
    %v875 = vld [vmem:[%s873 + $0x4] sm:$0xf]
    %v876 = vld [vmem:[%s873 + $0x8] sm:$0xf]
    %v877 = vld [vmem:[%s873 + $0xc] sm:$0xf]
    %v878 = vld [vmem:[%s873 + $0x10] sm:$0xf]
    %v879 = vld [vmem:[%s873 + $0x14] sm:$0xf]
    %v880 = vld [vmem:[%s873 + $0x18] sm:$0xf]
    %v881 = vld [vmem:[%s873 + $0x1c] sm:$0xf]
    %v882 = vld [vmem:[%s873 + $0x20] sm:$0xf]
    %v883 = vld [vmem:[%s873 + $0x24] sm:$0xf]
    %v884 = vld [vmem:[%s873 + $0x28] sm:$0xf]
    %v885 = vld [vmem:[%s873 + $0x2c] sm:$0xf]
    %v886 = vld [vmem:[%s873 + $0x30] sm:$0xf]
    %v887 = vld [vmem:[%s873 + $0x34] sm:$0xf]
    %v888 = vld [vmem:[%s873 + $0x38] sm:$0xf]
    %v889 = vld [vmem:[%s873 + $0x3c] sm:$0xf]
    %v890 = vld [vmem:[#allocation8 + $0x3] sm:$0x1]
    %v891 = vperm.slane %v890, 0
    %v908 = vunpack.c.l.b16 %v874
    %v909 = vunpack.c.l.b16 %v875
    %v910 = vunpack.c.l.b16 %v876
    %v911 = vunpack.c.l.b16 %v877
    %v912 = vunpack.c.l.b16 %v878
    %v913 = vunpack.c.l.b16 %v879
    %v914 = vunpack.c.l.b16 %v880
    %v915 = vunpack.c.l.b16 %v881
    %v916 = vunpack.c.l.b16 %v882
    %v917 = vunpack.c.l.b16 %v883
    %v918 = vunpack.c.l.b16 %v884
    %v919 = vunpack.c.l.b16 %v885
    %v920 = vunpack.c.l.b16 %v886
    %v921 = vunpack.c.l.b16 %v887
    %v922 = vunpack.c.l.b16 %v888
    %v923 = vunpack.c.l.b16 %v889
    %v924 = vpack.c.b16 %v909, %v908
    %v925 = vpack.c.b16 %v911, %v910
    %v926 = vpack.c.b16 %v913, %v912
    %v927 = vpack.c.b16 %v915, %v914
    %v928 = vpack.c.b16 %v917, %v916
    %v929 = vpack.c.b16 %v919, %v918
    %v930 = vpack.c.b16 %v921, %v920
    %v931 = vpack.c.b16 %v923, %v922
    %940 = vmatpush.bf16.msra.mxu0 %v931
    %941 = vmatpush.bf16.msra.mxu0 %v930
    %942 = vmatpush.bf16.msra.mxu0 %v929
    %943 = vmatpush.bf16.msra.mxu0 %v928
    %944 = vmatpush.bf16.msra.mxu0 %v927
    %945 = vmatpush.bf16.msra.mxu0 %v926
    %946 = vmatpush.bf16.msra.mxu0 %v925
    %947 = vmatpush.bf16.msra.mxu0 %v924
    %948 = vmatmul.bf16.gmra.mxu0 %v872
    %v949 = vpop.f32.mrf.mxu0
    %v950 = vadd.f32 %v891, %v949
    %v951 = vpop.f32.mrf.mxu0
    %952 = vdwg.mxu0
    %v953 = vmax.f32 %v950, 0.0
    %v954 = vpack.c.bf16 %v953, %v953
    %s955 = scalar_lea.vmem [#allocation7], 192
    %v956 = vld [vmem:[%s955] sm:$0xf]
    %v957 = vld [vmem:[%s955 + $0x4] sm:$0xf]
    %v958 = vld [vmem:[%s955 + $0x8] sm:$0xf]
    %v959 = vld [vmem:[%s955 + $0xc] sm:$0xf]
    %v960 = vld [vmem:[%s955 + $0x10] sm:$0xf]
    %v961 = vld [vmem:[%s955 + $0x14] sm:$0xf]
    %v962 = vld [vmem:[%s955 + $0x18] sm:$0xf]
    %v963 = vld [vmem:[%s955 + $0x1c] sm:$0xf]
    %v964 = vld [vmem:[%s955 + $0x20] sm:$0xf]
    %v965 = vld [vmem:[%s955 + $0x24] sm:$0xf]
    %v966 = vld [vmem:[%s955 + $0x28] sm:$0xf]
    %v967 = vld [vmem:[%s955 + $0x2c] sm:$0xf]
    %v968 = vld [vmem:[%s955 + $0x30] sm:$0xf]
    %v969 = vld [vmem:[%s955 + $0x34] sm:$0xf]
    %v970 = vld [vmem:[%s955 + $0x38] sm:$0xf]
    %v971 = vld [vmem:[%s955 + $0x3c] sm:$0xf]
    %v972 = vld [vmem:[#allocation8 + $0x4] sm:$0x1]
    %v973 = vperm.slane %v972, 0
    %v990 = vunpack.c.l.b16 %v956
    %v991 = vunpack.c.l.b16 %v957
    %v992 = vunpack.c.l.b16 %v958
    %v993 = vunpack.c.l.b16 %v959
    %v994 = vunpack.c.l.b16 %v960
    %v995 = vunpack.c.l.b16 %v961
    %v996 = vunpack.c.l.b16 %v962
    %v997 = vunpack.c.l.b16 %v963
    %v998 = vunpack.c.l.b16 %v964
    %v999 = vunpack.c.l.b16 %v965
    %v1000 = vunpack.c.l.b16 %v966
    %v1001 = vunpack.c.l.b16 %v967
    %v1002 = vunpack.c.l.b16 %v968
    %v1003 = vunpack.c.l.b16 %v969
    %v1004 = vunpack.c.l.b16 %v970
    %v1005 = vunpack.c.l.b16 %v971
    %v1006 = vpack.c.b16 %v991, %v990
    %v1007 = vpack.c.b16 %v993, %v992
    %v1008 = vpack.c.b16 %v995, %v994
    %v1009 = vpack.c.b16 %v997, %v996
    %v1010 = vpack.c.b16 %v999, %v998
    %v1011 = vpack.c.b16 %v1001, %v1000
    %v1012 = vpack.c.b16 %v1003, %v1002
    %v1013 = vpack.c.b16 %v1005, %v1004
    %1022 = vmatpush.bf16.msra.mxu0 %v1013
    %1023 = vmatpush.bf16.msra.mxu0 %v1012
    %1024 = vmatpush.bf16.msra.mxu0 %v1011
    %1025 = vmatpush.bf16.msra.mxu0 %v1010
    %1026 = vmatpush.bf16.msra.mxu0 %v1009
    %1027 = vmatpush.bf16.msra.mxu0 %v1008
    %1028 = vmatpush.bf16.msra.mxu0 %v1007
    %1029 = vmatpush.bf16.msra.mxu0 %v1006
    %1030 = vmatmul.bf16.gmra.mxu0 %v954
    %v1031 = vpop.f32.mrf.mxu0
    %v1032 = vadd.f32 %v973, %v1031
    %v1033 = vpop.f32.mrf.mxu0
    %1034 = vdwg.mxu0
    %v1035 = vpack.c.bf16 %v1032, %v1032
    %1036 = vst [vmem:[#allocation10] sm:$0xf] %v1035
    // Predicated region
    $region34: #{tpu_custom_call.1} parent=1 // pred_check
      _
    $region35: #{tpu_custom_call.1} parent=1 // pred_check_branch
      %1038 = sbr.rel (0) target = $region37
    $region36: #{tpu_custom_call.1} parent=1 // pred_region
      %1040 = vsyncadd [#allocation4], 0
      %s1042 = sshll.u32 [#allocation10], 4
      %s1043 = int_to_ptr.vmem [resolvable:$true] %s1042
      %s1044 = sshll.u32 %s4, 4
      %s1045 = int_to_ptr.hbm [resolvable:$true] %s1044
      %1047 = dma.vmem_to_hbm [thread:$0]  %s1043, 64, %s1045, [#allocation4]
    $region37: #{tpu_custom_call.1} parent=1 // pred_fallthru
      _
    // Predicated region
    $region38: #{tpu_custom_call.1} parent=1 // pred_check
      _
    $region39: #{tpu_custom_call.1} parent=1 // pred_check_branch
      %1049 = sbr.rel (0) target = $region41
    $region40: #{tpu_custom_call.1} parent=1 // pred_region
      %1051 = dma.done [#allocation4], 64
    $region41: #{tpu_custom_call.1} parent=1 // pred_fallthru
      _
    %1052 = vsyncpa [#allocation3], 1
    %1053 = vsyncpa [#allocation6], 1
    %1054 = vsyncpa [#allocation9], 1
    %1055 = vsyncpa [#allocation4], 1

</llo_original>
